<compile_context>
chip_gen: v7x
topology: tpu7x:2x2x1
jax: 0.10.0
libtpu: 0.0.40
codegen_flags: <defaults>
</compile_context>

<pallas_src>
import functools
import math

import jax
import jax.numpy as jnp
from jax.experimental import pallas as pl
from jax.experimental.pallas import tpu as pltpu


def _round_up(x, m):
    return (x + m - 1) // m * m


def _choose_tile_rows(rows, hw, itemsize):
    """Rows per block: multiple of 8, lane-friendly, VMEM-safe when double-buffered."""
    rows_pad8 = _round_up(rows, 8)
    if rows_pad8 <= 512:
        # Small problem: single block equal to the (row-padded) full extent.
        return rows_pad8
    # Keep one input block <= ~8 MiB so 2x (double buffering) stays well below
    # the 32 MiB scoped-VMEM default and v7x's 64 MiB physical VMEM.
    budget = 8 * 1024 * 1024
    per_row = max(hw * itemsize, 1)
    tile = min(1024, budget // per_row)
    tile = max(128, (tile // 128) * 128)  # multiple of 128 -> lane-dense output store
    return tile


def _gem_kernel(p_ref, x_ref, o_ref, *, eps, hw):
    # p_ref: (1,) learnable exponent in SMEM
    # x_ref: (TILE_R, HW) input block in VMEM
    # o_ref: (1, TILE_R) lane-dense output block in VMEM
    p = p_ref[0]
    inv_p = 1.0 / p

    x = x_ref[...].astype(jnp.float32)          # compute / accumulate in f32
    xc = jnp.maximum(x, jnp.float32(eps))       # clamp(min=eps)          (VPU)
    xp = jnp.exp(p * jnp.log(xc))               # x**p == exp(p*log(x))   (EUP)
    s = jnp.sum(xp, axis=-1)                    # (TILE_R,) lane reduce   (XLU)

    # mean**(1/p) == sum**(1/p) * HW**(-1/p): fold the 1/HW scale into a scalar.
    scale = jnp.exp(-inv_p * math.log(float(hw)))
    y = jnp.exp(inv_p * jnp.log(s)) * scale     # (TILE_R,)
    o_ref[...] = y.reshape(1, -1).astype(o_ref.dtype)


def gem_pallas(x_nchw, p, eps=1e-6):
    """GeM pooling. x_nchw: (N, C, H, W) float array; p: shape-(1,) parameter."""
    N, C, H, W = x_nchw.shape
    rows, hw = N * C, H * W
    itemsize = jnp.dtype(x_nchw.dtype).itemsize

    tile_r = _choose_tile_rows(rows, hw, itemsize)
    rows_pad = _round_up(rows, tile_r)
    num_tiles = rows_pad // tile_r

    x_flat = x_nchw.reshape(rows, hw)
    if rows_pad != rows:
        # Pad rows with 1.0 (log(1) == 0): padded rows compute to 1 and are dropped.
        x_flat = jnp.pad(x_flat, ((0, rows_pad - rows), (0, 0)), constant_values=1.0)

    kernel = functools.partial(_gem_kernel, eps=float(eps), hw=hw)

    cost = pl.CostEstimate(
        flops=int(3 * rows_pad * hw),                 # clamp + p*log mul + sum
        transcendentals=int(2 * rows_pad * hw),       # log + exp per element
        bytes_accessed=int(rows_pad * hw * itemsize + rows_pad * itemsize),
    )

    out = pl.pallas_call(
        kernel,
        out_shape=jax.ShapeDtypeStruct((1, rows_pad), x_nchw.dtype),
        grid_spec=pltpu.PrefetchScalarGridSpec(
            num_scalar_prefetch=0,
            grid=(num_tiles,),
            in_specs=[
                pl.BlockSpec(memory_space=pltpu.MemorySpace.SMEM),     # p (scalar)
                pl.BlockSpec((tile_r, hw), lambda i: (i, 0)),          # x row tile
            ],
            out_specs=pl.BlockSpec((1, tile_r), lambda i: (0, i)),     # lane-dense out
        ),
        compiler_params=pltpu.CompilerParams(
            dimension_semantics=("parallel",),     # shard row tiles across v7x's 2 TCs
            vmem_limit_bytes=32 * 1024 * 1024,
        ),
        cost_estimate=cost,
    )(p.astype(jnp.float32), x_flat)

    # TODO(synk): for pathologically large H*W (a 128-row block exceeding the VMEM
    # budget) also tile the HW axis as a trailing "arbitrary" reduction grid axis
    # with a masked partial tile; unnecessary for realistic GeM feature maps.
    return out.reshape(rows_pad)[:rows].reshape(N, C, 1, 1)


def gem_reference(x_nchw, p, eps=1e-6):
    """Plain-JAX reference matching the torch F.avg_pool2d-based GeM."""
    xc = jnp.maximum(x_nchw, eps)
    xp = jnp.power(xc, p[0])
    m = jnp.mean(xp, axis=(-2, -1), keepdims=True)
    return jnp.power(m, 1.0 / p[0])


if __name__ == "__main__":
    key = jax.random.PRNGKey(0)
    N, C, H, W = 2, 4, 16, 16

    # Deterministic inputs (positive-ish activations, like post-ReLU features).
    x = jax.random.uniform(key, (N, C, H, W), dtype=jnp.float32)

    # Parameter init as in GeM.__init__: p = ones(1) * 3
    p = jnp.ones((1,), dtype=jnp.float32) * 3.0
    eps = 1e-6

    y = gem_pallas(x, p, eps=eps)
    y = jax.block_until_ready(y)

    y_ref = gem_reference(x, p, eps=eps)

    assert y.shape == (N, C, 1, 1), y.shape
    assert jnp.allclose(y, y_ref, rtol=1e-5, atol=1e-5), (
        f"max abs err = {jnp.max(jnp.abs(y - y_ref))}"
    )

    print("KERNEL_OK")
</pallas_src>

<mosaic_0001>
module attributes {stable_mosaic.version = 11 : i64} {
  func.func @_gem_kernel(%arg0: i32, %arg1: memref<1xf32, #tpu.memory_space<smem>>, %arg2: memref<8x256xf32, #tpu.memory_space<vmem>>, %arg3: memref<1x8xf32, #tpu.memory_space<vmem>>) attributes {dimension_semantics = [#tpu.dimension_semantics<parallel>], iteration_bounds = array<i64: 1>, scalar_prefetch = 0 : i64, scratch_operands = 0 : i64, tpu.core_type = #tpu.core_type<tc>, window_params = [{transform_indices = @transform_0, window_bounds = array<i64: 1>}, {transform_indices = @transform_1, window_bounds = array<i64: 8, 256>}, {transform_indices = @transform_2, window_bounds = array<i64: 1, 8>}]} {
    %c0 = arith.constant 0 : index
    %0 = memref.load %arg1[%c0] : memref<1xf32, #tpu.memory_space<smem>>
    %cst = arith.constant 1.000000e+00 : f32
    %1 = arith.divf %cst, %0 : f32
    %c0_0 = arith.constant 0 : index
    %c0_1 = arith.constant 0 : index
    %2 = vector.load %arg2[%c0_0, %c0_1] : memref<8x256xf32, #tpu.memory_space<vmem>>, vector<8x256xf32>
    %cst_2 = arith.constant 9.99999997E-7 : f32
    %3 = vector.broadcast %cst_2 : f32 to vector<8x256xf32>
    %4 = arith.maximumf %2, %3 : vector<8x256xf32>
    %5 = math.log %4 : vector<8x256xf32>
    %6 = vector.broadcast %0 : f32 to vector<8x256xf32>
    %7 = arith.mulf %6, %5 : vector<8x256xf32>
    %8 = math.exp %7 : vector<8x256xf32>
    %cst_3 = arith.constant dense<0.000000e+00> : vector<8xf32>
    %9 = vector.multi_reduction <add>, %8, %cst_3 [1] : vector<8x256xf32> to vector<8xf32>
    %cst_4 = arith.constant 0.000000e+00 : f32
    %10 = arith.subf %cst_4, %1 : f32
    %cst_5 = arith.constant 5.54517746 : f32
    %11 = arith.mulf %10, %cst_5 : f32
    %12 = math.exp %11 : f32
    %13 = math.log %9 : vector<8xf32>
    %14 = vector.broadcast %1 : f32 to vector<8xf32>
    %15 = arith.mulf %14, %13 : vector<8xf32>
    %16 = math.exp %15 : vector<8xf32>
    %17 = vector.broadcast %12 : f32 to vector<8xf32>
    %18 = arith.mulf %16, %17 : vector<8xf32>
    %19 = vector.shape_cast %18 : vector<8xf32> to vector<1x8xf32>
    %c0_6 = arith.constant 0 : index
    %c0_7 = arith.constant 0 : index
    %20 = vector.load %arg3[%c0_6, %c0_7] : memref<1x8xf32, #tpu.memory_space<vmem>>, vector<1x8xf32>
    tpu.vector_store %arg3[%c0_6, %c0_7], %19 {strides = array<i32>} : memref<1x8xf32, #tpu.memory_space<vmem>>, vector<1x8xf32>,
    return
  }
  func.func @transform_0(%arg0: i32) -> i32 {
    %c0_i32 = arith.constant 0 : i32
    %c0_i32_0 = arith.constant 0 : i32
    return %c0_i32 : i32
  }
  func.func @transform_1(%arg0: i32) -> (i32, i32) {
    %c0_i32 = arith.constant 0 : i32
    %c0_i32_0 = arith.constant 0 : i32
    return %arg0, %c0_i32 : i32, i32
  }
  func.func @transform_2(%arg0: i32) -> (i32, i32) {
    %c0_i32 = arith.constant 0 : i32
    %c0_i32_0 = arith.constant 0 : i32
    return %c0_i32, %arg0 : i32, i32
  }
}

</mosaic_0001>

<llo_original>
// kernel: tpu_custom_call.1
$region0: #{tpu_custom_call.1}
  #allocation0 [shape = 'u32[]', space=smem, size = 0x4, offset = 0x4, fixed_abs, tag = 'smem constant byte address 0x4 - core index']
  #allocation1 [shape = 'u32[144,128]{1,0:T(1,128)}', space=vmem, size = 0x12000, scoped, tag = 'internal scratch']
  #allocation2 [shape = 'f32[1]{0:T(128)S(6)}', space=smem, size = 0x200, scoped, tag = 'scoped memory for tpu_custom_call.1']
  %s0 = inlined_call_operand.<no memory space> [shape: f32[1], index: 0, kind: input, shape index: {}]
  %s1 = inlined_call_operand.hbm [shape: f32[8,256], index: 1, kind: input, shape index: {}]
  %s2 = inlined_call_operand.hbm [shape: f32[1,8], index: 2, kind: output, shape index: {}]
  %s3 = sld [smem:[#allocation0]]
  $region22: #{tpu_custom_call.1} parent=0
    _
  %s5 = ssub.s32 1, %s3
  %s6 = scalar_select 0, %s5, %s3
  %7 = sst [smem:[#allocation2]] %s0
  $region1: #{tpu_custom_call.1} parent=0
    #allocation3 [shape = 'u8[8192]{0}', space=vmem, size = 0x2000, scoped, tag = 'input window, operand 1, single buffered']
    #allocation4 [shape = 's32[1]{0}', space=sflag, size = 0x4, scoped, tag = 'scoped memory for tpu_custom_call.1']
    #allocation5 [shape = 's32[1]{0}', space=sflag, size = 0x4, scoped, tag = 'scoped memory for tpu_custom_call.1']
    #allocation6 [shape = 'u8[512]{0}', space=vmem, size = 0x400, scoped, tag = 'output window, operand 0, single buffered']
    %8 = vsyncpa [#allocation4], 0
    %9 = vsyncpa [#allocation5], 0
    // Predicated region
    $region2: #{tpu_custom_call.1} parent=1 // pred_check
      _
    $region3: #{tpu_custom_call.1} parent=1 // pred_check_branch
      %11 = sbr.rel (0) target = $region5
    $region4: #{tpu_custom_call.1} parent=1 // pred_region
      _
    $region5: #{tpu_custom_call.1} parent=1 // pred_fallthru
      _
    // Predicated region
    $region6: #{tpu_custom_call.1} parent=1 // pred_check
      _
    $region7: #{tpu_custom_call.1} parent=1 // pred_check_branch
      %13 = sbr.rel (0) target = $region9
    $region8: #{tpu_custom_call.1} parent=1 // pred_region
      %s15 = ssub.s32 256, 256
      %16 = vsyncadd [#allocation4], %s15
      %s18 = sshll.u32 [#allocation3], 4
      %s19 = int_to_ptr.vmem [resolvable:$true] %s18
      %21 = dma.hbm_to_vmem [thread:$0]  %s1, 256, %s19, [#allocation4]
    $region9: #{tpu_custom_call.1} parent=1 // pred_fallthru
      _
    // Predicated region
    $region10: #{tpu_custom_call.1} parent=1 // pred_check
      _
    $region11: #{tpu_custom_call.1} parent=1 // pred_check_branch
      %23 = sbr.rel (0) target = $region13
    $region12: #{tpu_custom_call.1} parent=1 // pred_region
      %24 = dma.done [#allocation4], 256
    $region13: #{tpu_custom_call.1} parent=1 // pred_fallthru
      _
    %s25 = sld [smem:[#allocation2]]
    %v26 = vstv %s25
    %v27 = vrcp.pop %v26
    %s28 = vtos %v27
    %v29 = vld [vmem:[#allocation3] sm:$0xff]
    %v30 = vld [vmem:[#allocation3 + $0x8] sm:$0xff]
    %v31 = vmax.f32 %v29, 1e-06
    %v32 = vmax.f32 %v30, 1e-06
    %v33 = vlog2.pop %v31
    %v34 = vmul.f32 %v33, 0.6931472
    %v35 = vlog2.pop %v32
    %v36 = vmul.f32 %v35, 0.6931472
    %v37 = vstv %s25
    %v38 = vmul.f32 %v37, %v34
    %v39 = vmul.f32 %v37, %v36
    %v40 = vmul.f32 %v38, 1.442695
    %v41 = vpow.pop %v40
    %v42 = vmul.f32 %v39, 1.442695
    %v43 = vpow.pop %v42
    %v44 = vadd.f32 %v41, %v43
    %45 = vadd.xlane.f32.xlu0 %v44
    %v46 = vpop.xlane.xlu0 %45
    %s47 = ssub.f32 0.0, %s28
    %s48 = smul.f32 %s47, 5.5451775
    %v49 = vstv %s48
    %v50 = vmul.f32 %v49, 1.442695
    %v51 = vpow.pop %v50
    %s52 = vtos %v51
    %v53 = vlog2.pop %v46
    %v54 = vmul.f32 %v53, 0.6931472
    %v55 = vstv %s28
    %v56 = vmul.f32 %v55, %v54
    %v57 = vmul.f32 %v56, 1.442695
    %v58 = vpow.pop %v57
    %v59 = vstv %s52
    %v60 = vmul.f32 %v58, %v59
    %v62 = vlaneseq
    %v63 = vand.u32 %v62, 127
    %v64 = vlaneseq
    %v65 = vshrl.u32 %v64, 7
    %v66 = vsub.s32 %v63, %v65
    %v67 = vrot.slane %v60, %v66
    %vm69 = vcmask 57344
    %70 = vst.msk [vmem:[#allocation6] sm:$0x1] %vm69, %v67
    // Predicated region
    $region14: #{tpu_custom_call.1} parent=1 // pred_check
      _
    $region15: #{tpu_custom_call.1} parent=1 // pred_check_branch
      %72 = sbr.rel (0) target = $region17
    $region16: #{tpu_custom_call.1} parent=1 // pred_region
      %s74 = ssub.s32 16, 16
      %75 = vsyncadd [#allocation5], %s74
      %s77 = sshll.u32 [#allocation6], 4
      %s78 = int_to_ptr.vmem [resolvable:$true] %s77
      %80 = dma.vmem_to_hbm [thread:$0]  %s78, 16, %s2, [#allocation5]
    $region17: #{tpu_custom_call.1} parent=1 // pred_fallthru
      _
    // Predicated region
    $region18: #{tpu_custom_call.1} parent=1 // pred_check
      _
    $region19: #{tpu_custom_call.1} parent=1 // pred_check_branch
      %82 = sbr.rel (0) target = $region21
    $region20: #{tpu_custom_call.1} parent=1 // pred_region
      %83 = dma.done [#allocation5], 16
    $region21: #{tpu_custom_call.1} parent=1 // pred_fallthru
      _
    %84 = vsyncpa [#allocation4], 1
    %85 = vsyncpa [#allocation5], 1

</llo_original>
